<compile_context>
chip_gen: v6e
topology: v6e:2x2x1
jax: 0.10.0
libtpu: 0.0.40
codegen_flags: <defaults>
</compile_context>

<pallas_src>
import functools

import jax
import jax.numpy as jnp
from jax.experimental import pallas as pl
from jax.experimental.pallas import tpu as pltpu

_LANE = 128


def _round_up(x, m):
    return (x + m - 1) // m * m


# TODO(synk): nn.GELU() defaults to the exact erf form; we use the tanh approximation
# (max abs error ~1e-3) since erf has no guaranteed Mosaic lowering.
def _gelu(x):
    c = 0.7978845608028654  # sqrt(2/pi)
    return 0.5 * x * (1.0 + jnp.tanh(c * (x + 0.044715 * x * x * x)))


def _sigmoid(x):
    return 1.0 / (1.0 + jnp.exp(-x))


def _gat_kernel(inp_ref, adj_ref, wqk_ref, bqk_ref, wv_ref, bv_ref, o_ref, *, scale):
    # inp_ref: (N, Fin)   adj_ref: (N, N)   w*: (Fin, Fout)   b*: (1, Fout)
    x = inp_ref[...]            # compute dtype (f32 or bf16)
    cd = x.dtype

    # Linear layers: MXU matmuls with f32 accumulation, f32 element-wise epilogue.
    h_qk = jnp.dot(x, wqk_ref[...], preferred_element_type=jnp.float32)
    h_qk = h_qk + bqk_ref[...].astype(jnp.float32)

    h_v = jnp.dot(x, wv_ref[...], preferred_element_type=jnp.float32)
    h_v = _gelu(h_v + bv_ref[...].astype(jnp.float32))

    # scores[i, j] = <h_qk[i], h_qk[j]>  (contract the feature axis of both operands;
    # avoids materializing an explicit transpose).
    scores = jax.lax.dot_general(
        h_qk.astype(cd), h_qk.astype(cd),
        dimension_numbers=(((1,), (1,)), ((), ())),
        preferred_element_type=jnp.float32)

    att = _sigmoid(scores * scale) * adj_ref[...].astype(jnp.float32)

    out = jnp.dot(att.astype(cd), h_v.astype(cd),
                  preferred_element_type=jnp.float32)
    o_ref[...] = out.astype(o_ref.dtype)


@jax.jit
def gat_layer_forward(inp, adj, params):
    """inp: (B, N, F_in); adj: (B, N, N); params: wqk/bqk/wv/bv (Linear weights transposed)."""
    B, N, f_in = inp.shape
    f_out = params["wqk"].shape[1]
    scale = float(f_out) ** -0.5          # uses the *unpadded* feature dim (PyTorch semantics)

    cd = inp.dtype                        # compute dtype for the MXU operands
    n_p = _round_up(N, _LANE)             # node axis is the lane axis of adj / scores
    fi_p = _round_up(f_in, _LANE)
    fo_p = _round_up(f_out, _LANE)

    def pad2(x, r, c):
        return jnp.pad(x, ((0, r - x.shape[0]), (0, c - x.shape[1])))

    inp_p = jnp.pad(inp, ((0, 0), (0, n_p - N), (0, fi_p - f_in))).astype(cd)
    adj_p = jnp.pad(adj, ((0, 0), (0, n_p - N), (0, n_p - N))).astype(cd)
    wqk = pad2(params["wqk"], fi_p, fo_p).astype(cd)
    wv = pad2(params["wv"], fi_p, fo_p).astype(cd)
    bqk = pad2(params["bqk"], 1, fo_p).astype(jnp.float32)
    bv = pad2(params["bv"], 1, fo_p).astype(jnp.float32)

    full = lambda shape: pl.BlockSpec(shape, lambda b: (0,) * len(shape))

    out_p = pl.pallas_call(
        functools.partial(_gat_kernel, scale=scale),
        out_shape=jax.ShapeDtypeStruct((B, n_p, fo_p), cd),
        grid_spec=pltpu.PrefetchScalarGridSpec(
            num_scalar_prefetch=0,
            grid=(B,),
            in_specs=[
                pl.BlockSpec((None, n_p, fi_p), lambda b: (b, 0, 0)),   # inp (per graph)
                pl.BlockSpec((None, n_p, n_p), lambda b: (b, 0, 0)),    # adj (per graph)
                full(wqk.shape), full(bqk.shape),                       # QK weights (constant)
                full(wv.shape), full(bv.shape),                         # V weights (constant)
            ],
            out_specs=pl.BlockSpec((None, n_p, fo_p), lambda b: (b, 0, 0)),
        ),
        compiler_params=pltpu.CompilerParams(
            dimension_semantics=("parallel",),   # megacore split over the batch on v7x
        ),
    )(inp_p, adj_p, wqk, bqk, wv, bv)

    return out_p[:, :N, :f_out]


def init_params(key, in_features, out_features):
    """Deterministic synthetic init matching nn.Linear defaults.
    Weights stored transposed as (in_features, out_features); biases as (1, out_features)."""
    params = {}
    for name, k in zip(("qk", "v"), jax.random.split(key, 2)):
        kw, kb = jax.random.split(k)
        bound = 1.0 / (in_features ** 0.5)
        params[f"w{name}"] = jax.random.uniform(
            kw, (in_features, out_features), jnp.float32, -bound, bound)
        params[f"b{name}"] = jax.random.uniform(
            kb, (1, out_features), jnp.float32, -bound, bound)
    return params


def reference_forward(inp, adj, params):
    """Pure-JAX reference of the PyTorch forward (high-precision matmuls)."""
    hp = jax.lax.Precision.HIGHEST
    h_qk = jnp.einsum("bnf,fo->bno", inp, params["wqk"], precision=hp) + params["bqk"]
    h_v = _gelu(jnp.einsum("bnf,fo->bno", inp, params["wv"], precision=hp) + params["bv"])
    scale = params["wqk"].shape[1] ** -0.5
    scores = jnp.einsum("bnd,bmd->bnm", h_qk, h_qk, precision=hp)
    att = _sigmoid(scores * scale) * adj
    return jnp.einsum("bnm,bmd->bnd", att, h_v, precision=hp)


if __name__ == "__main__":
    key = jax.random.PRNGKey(0)
    k_inp, k_adj, k_p = jax.random.split(key, 3)

    B, N, F_IN, F_OUT = 2, 16, 32, 32

    inp = jax.random.normal(k_inp, (B, N, F_IN), jnp.float32)
    a = (jax.random.uniform(k_adj, (B, N, N)) < 0.3).astype(jnp.float32)
    adj = jnp.maximum(a, jnp.transpose(a, (0, 2, 1)))           # symmetric 0/1 adjacency
    adj = jnp.maximum(adj, jnp.eye(N, dtype=jnp.float32)[None]) # + self loops

    params = init_params(k_p, F_IN, F_OUT)
    ref = reference_forward(inp, adj, params)

    # f32 path (tolerance allows for MXU f32-emulation pass-count differences
    # vs. the XLA HIGHEST-precision reference).
    out = jax.block_until_ready(gat_layer_forward(inp, adj, params))
    assert out.shape == (B, N, F_OUT)
    rel_err = jnp.max(jnp.abs(out - ref)) / (jnp.max(jnp.abs(ref)) + 1e-6)
    assert float(rel_err) < 1e-2, f"f32 mismatch vs. reference: {rel_err}"

    # bf16 MXU path (f32 accumulation): throughput mode, looser tolerance.
    out_bf16 = jax.block_until_ready(
        gat_layer_forward(inp.astype(jnp.bfloat16), adj, params)).astype(jnp.float32)
    rel_err_bf16 = jnp.max(jnp.abs(out_bf16 - ref)) / (jnp.max(jnp.abs(ref)) + 1e-6)
    assert float(rel_err_bf16) < 5e-2, f"bf16 mismatch vs. reference: {rel_err_bf16}"

    print("KERNEL_OK")
</pallas_src>

<mosaic_0001>
module attributes {stable_mosaic.version = 11 : i64} {
  func.func @_gat_kernel(%arg0: i32, %arg1: memref<1x128x128xf32, #tpu.memory_space<vmem>>, %arg2: memref<1x128x128xf32, #tpu.memory_space<vmem>>, %arg3: memref<128x128xf32, #tpu.memory_space<vmem>>, %arg4: memref<1x128xf32, #tpu.memory_space<vmem>>, %arg5: memref<128x128xf32, #tpu.memory_space<vmem>>, %arg6: memref<1x128xf32, #tpu.memory_space<vmem>>, %arg7: memref<1x128x128xf32, #tpu.memory_space<vmem>>) attributes {dimension_semantics = [#tpu.dimension_semantics<parallel>], iteration_bounds = array<i64: 2>, scalar_prefetch = 0 : i64, scratch_operands = 0 : i64, tpu.core_type = #tpu.core_type<tc>, window_params = [{transform_indices = @transform_0, window_bounds = array<i64: 1, 128, 128>}, {transform_indices = @transform_1, window_bounds = array<i64: 1, 128, 128>}, {pipeline_mode = #tpu.pipeline_mode<synchronous>, transform_indices = @transform_2, window_bounds = array<i64: 128, 128>}, {pipeline_mode = #tpu.pipeline_mode<synchronous>, transform_indices = @transform_3, window_bounds = array<i64: 1, 128>}, {pipeline_mode = #tpu.pipeline_mode<synchronous>, transform_indices = @transform_4, window_bounds = array<i64: 128, 128>}, {pipeline_mode = #tpu.pipeline_mode<synchronous>, transform_indices = @transform_5, window_bounds = array<i64: 1, 128>}, {transform_indices = @transform_6, window_bounds = array<i64: 1, 128, 128>}]} {
    %c0 = arith.constant 0 : index
    %c0_0 = arith.constant 0 : index
    %c0_1 = arith.constant 0 : index
    %0 = vector.load %arg1[%c0, %c0_0, %c0_1] : memref<1x128x128xf32, #tpu.memory_space<vmem>>, vector<1x128x128xf32>
    %1 = vector.shape_cast %0 : vector<1x128x128xf32> to vector<128x128xf32>
    %c0_2 = arith.constant 0 : index
    %c0_3 = arith.constant 0 : index
    %2 = vector.load %arg3[%c0_2, %c0_3] : memref<128x128xf32, #tpu.memory_space<vmem>>, vector<128x128xf32>
    %cst = arith.constant dense<0.000000e+00> : vector<128x128xf32>
    %3 = tpu.matmul %1, %2, %cst {dimension_numbers = #tpu.dot_dimension_numbers<[1], [0], [0], [1], [0, 0, 1, 1], [], []>} : vector<128x128xf32>, vector<128x128xf32>, vector<128x128xf32> -> vector<128x128xf32>
    %c0_4 = arith.constant 0 : index
    %c0_5 = arith.constant 0 : index
    %4 = vector.load %arg4[%c0_4, %c0_5] : memref<1x128xf32, #tpu.memory_space<vmem>>, vector<1x128xf32>
    %5 = vector.broadcast %4 : vector<1x128xf32> to vector<128x128xf32>
    %6 = arith.addf %3, %5 : vector<128x128xf32>
    %c0_6 = arith.constant 0 : index
    %c0_7 = arith.constant 0 : index
    %7 = vector.load %arg5[%c0_6, %c0_7] : memref<128x128xf32, #tpu.memory_space<vmem>>, vector<128x128xf32>
    %cst_8 = arith.constant dense<0.000000e+00> : vector<128x128xf32>
    %8 = tpu.matmul %1, %7, %cst_8 {dimension_numbers = #tpu.dot_dimension_numbers<[1], [0], [0], [1], [0, 0, 1, 1], [], []>} : vector<128x128xf32>, vector<128x128xf32>, vector<128x128xf32> -> vector<128x128xf32>
    %c0_9 = arith.constant 0 : index
    %c0_10 = arith.constant 0 : index
    %9 = vector.load %arg6[%c0_9, %c0_10] : memref<1x128xf32, #tpu.memory_space<vmem>>, vector<1x128xf32>
    %10 = vector.broadcast %9 : vector<1x128xf32> to vector<128x128xf32>
    %11 = arith.addf %8, %10 : vector<128x128xf32>
    %cst_11 = arith.constant 5.000000e-01 : f32
    %12 = vector.broadcast %cst_11 : f32 to vector<128x128xf32>
    %13 = arith.mulf %12, %11 : vector<128x128xf32>
    %cst_12 = arith.constant 4.471500e-02 : f32
    %14 = vector.broadcast %cst_12 : f32 to vector<128x128xf32>
    %15 = arith.mulf %14, %11 : vector<128x128xf32>
    %16 = arith.mulf %15, %11 : vector<128x128xf32>
    %17 = arith.mulf %16, %11 : vector<128x128xf32>
    %18 = arith.addf %11, %17 : vector<128x128xf32>
    %cst_13 = arith.constant 0.797884583 : f32
    %19 = vector.broadcast %cst_13 : f32 to vector<128x128xf32>
    %20 = arith.mulf %19, %18 : vector<128x128xf32>
    %21 = math.tanh %20 : vector<128x128xf32>
    %cst_14 = arith.constant 1.000000e+00 : f32
    %22 = vector.broadcast %cst_14 : f32 to vector<128x128xf32>
    %23 = arith.addf %22, %21 : vector<128x128xf32>
    %24 = arith.mulf %13, %23 : vector<128x128xf32>
    %cst_15 = arith.constant dense<0.000000e+00> : vector<128x128xf32>
    %25 = tpu.matmul %6, %6, %cst_15 {dimension_numbers = #tpu.dot_dimension_numbers<[1], [1], [0], [0], [0, 0, 1, 0], [], []>} : vector<128x128xf32>, vector<128x128xf32>, vector<128x128xf32> -> vector<128x128xf32>
    %cst_16 = arith.constant 0.176776692 : f32
    %26 = vector.broadcast %cst_16 : f32 to vector<128x128xf32>
    %27 = arith.mulf %25, %26 : vector<128x128xf32>
    %cst_17 = arith.constant 0.000000e+00 : f32
    %28 = vector.broadcast %cst_17 : f32 to vector<128x128xf32>
    %29 = arith.subf %28, %27 : vector<128x128xf32>
    %30 = math.exp %29 : vector<128x128xf32>
    %cst_18 = arith.constant 1.000000e+00 : f32
    %31 = vector.broadcast %cst_18 : f32 to vector<128x128xf32>
    %32 = arith.addf %31, %30 : vector<128x128xf32>
    %cst_19 = arith.constant 1.000000e+00 : f32
    %33 = vector.broadcast %cst_19 : f32 to vector<128x128xf32>
    %34 = arith.divf %33, %32 : vector<128x128xf32>
    %c0_20 = arith.constant 0 : index
    %c0_21 = arith.constant 0 : index
    %c0_22 = arith.constant 0 : index
    %35 = vector.load %arg2[%c0_20, %c0_21, %c0_22] : memref<1x128x128xf32, #tpu.memory_space<vmem>>, vector<1x128x128xf32>
    %36 = vector.shape_cast %35 : vector<1x128x128xf32> to vector<128x128xf32>
    %37 = arith.mulf %34, %36 : vector<128x128xf32>
    %cst_23 = arith.constant dense<0.000000e+00> : vector<128x128xf32>
    %38 = tpu.matmul %37, %24, %cst_23 {dimension_numbers = #tpu.dot_dimension_numbers<[1], [0], [0], [1], [0, 0, 1, 1], [], []>} : vector<128x128xf32>, vector<128x128xf32>, vector<128x128xf32> -> vector<128x128xf32>
    %c0_24 = arith.constant 0 : index
    %c0_25 = arith.constant 0 : index
    %c0_26 = arith.constant 0 : index
    %39 = vector.load %arg7[%c0_24, %c0_25, %c0_26] : memref<1x128x128xf32, #tpu.memory_space<vmem>>, vector<1x128x128xf32>
    %40 = vector.shape_cast %39 : vector<1x128x128xf32> to vector<128x128xf32>
    %41 = vector.shape_cast %38 : vector<128x128xf32> to vector<1x128x128xf32>
    tpu.vector_store %arg7[%c0_24, %c0_25, %c0_26], %41 {strides = array<i32>} : memref<1x128x128xf32, #tpu.memory_space<vmem>>, vector<1x128x128xf32>,
    return
  }
  func.func @transform_0(%arg0: i32) -> (i32, i32, i32) {
    %c0_i32 = arith.constant 0 : i32
    %c0_i32_0 = arith.constant 0 : i32
    %c0_i32_1 = arith.constant 0 : i32
    return %arg0, %c0_i32, %c0_i32_0 : i32, i32, i32
  }
  func.func @transform_1(%arg0: i32) -> (i32, i32, i32) {
    %c0_i32 = arith.constant 0 : i32
    %c0_i32_0 = arith.constant 0 : i32
    %c0_i32_1 = arith.constant 0 : i32
    return %arg0, %c0_i32, %c0_i32_0 : i32, i32, i32
  }
  func.func @transform_2(%arg0: i32) -> (i32, i32) {
    %c0_i32 = arith.constant 0 : i32
    %c0_i32_0 = arith.constant 0 : i32
    %c0_i32_1 = arith.constant 0 : i32
    return %c0_i32, %c0_i32_0 : i32, i32
  }
  func.func @transform_3(%arg0: i32) -> (i32, i32) {
    %c0_i32 = arith.constant 0 : i32
    %c0_i32_0 = arith.constant 0 : i32
    %c0_i32_1 = arith.constant 0 : i32
    return %c0_i32, %c0_i32_0 : i32, i32
  }
  func.func @transform_4(%arg0: i32) -> (i32, i32) {
    %c0_i32 = arith.constant 0 : i32
    %c0_i32_0 = arith.constant 0 : i32
    %c0_i32_1 = arith.constant 0 : i32
    return %c0_i32, %c0_i32_0 : i32, i32
  }
  func.func @transform_5(%arg0: i32) -> (i32, i32) {
    %c0_i32 = arith.constant 0 : i32
    %c0_i32_0 = arith.constant 0 : i32
    %c0_i32_1 = arith.constant 0 : i32
    return %c0_i32, %c0_i32_0 : i32, i32
  }
  func.func @transform_6(%arg0: i32) -> (i32, i32, i32) {
    %c0_i32 = arith.constant 0 : i32
    %c0_i32_0 = arith.constant 0 : i32
    %c0_i32_1 = arith.constant 0 : i32
    return %arg0, %c0_i32, %c0_i32_0 : i32, i32, i32
  }
}

</mosaic_0001>

<llo_original>
// kernel: gat_layer_forward.1
$region0: #{gat_layer_forward.1}
  #allocation0 [shape = 'u32[]', space=smem, size = 0x4, offset = 0x4, fixed_abs, tag = 'smem constant byte address 0x4 - core index']
  #allocation1 [shape = 'u32[144,128]{1,0:T(1,128)}', space=vmem, size = 0x12000, scoped, tag = 'internal scratch']
  %s0 = inlined_call_operand.vmem [shape: f32[2,128,128], index: 0, kind: input, shape index: {}]
  %s1 = inlined_call_operand.vmem [shape: f32[2,128,128], index: 1, kind: input, shape index: {}]
  %s2 = inlined_call_operand.vmem [shape: f32[128,128], index: 2, kind: input, shape index: {}]
  %s3 = inlined_call_operand.vmem [shape: f32[1,128], index: 3, kind: input, shape index: {}]
  %s4 = inlined_call_operand.vmem [shape: f32[128,128], index: 4, kind: input, shape index: {}]
  %s5 = inlined_call_operand.vmem [shape: f32[1,128], index: 5, kind: input, shape index: {}]
  %s6 = inlined_call_operand.vmem [shape: f32[2,128,128], index: 6, kind: output, shape index: {}]
  %s7 = sld [smem:[#allocation0]]
  $region57: #{gat_layer_forward.1} parent=0
    _
  %s9 = ssub.s32 1, %s7
  %s10 = scalar_select 0, %s9, %s7
  loop: start=0, step=1, limit=4
  $region2: #{gat_layer_forward.1} parent=0 // loop_pre_header
    _
  $region3: #{gat_layer_forward.1} parent=0 // loop_header
    %s12 = sphi 0, %s16
    %p13 = scmp.ge.s32.totalorder %s12, 4
    %s22 = sphi 0, %s24
    %s25 = sphi 0, %s22
    %s26 = sphi 0, %s25
    %s42 = sphi 0, %s26
    %s48 = sphi 0, %s50
    %s51 = sphi 0, %s48
    %s52 = sphi 0, %s51
    %s68 = sphi 0, %s52
    %s72 = sphi 0, %s72
    %s74 = sphi 0, %s72
    %s75 = sphi 0, %s74
    %s89 = sphi 0, %s75
    %s93 = sphi 0, %s93
    %s95 = sphi 0, %s93
    %s96 = sphi 0, %s95
    %s110 = sphi 0, %s96
    %s114 = sphi 0, %s114
    %s116 = sphi 0, %s114
    %s117 = sphi 0, %s116
    %s131 = sphi 0, %s117
    %s135 = sphi 0, %s135
    %s137 = sphi 0, %s135
    %s138 = sphi 0, %s137
    %s152 = sphi 0, %s138
    %s158 = sphi 0, %s160
    %s161 = sphi 0, %s158
    %s162 = sphi 0, %s161
    %s178 = sphi 0, %s162
  $region4: #{gat_layer_forward.1} parent=0 // loop_header_branch
    %15 = sbr.rel (%p13) target = $region8
  $region5: #{gat_layer_forward.1} parent=0 // loop_body
    %s17 = ssub.s32 %s12, 1
    %s18 = ssub.s32 %s12, 2
    %s19 = sadd.s32 %s12, 1
    %s20 = ssub.s32 %s12, %s19
    %p21 = scmp.eq.s32.totalorder %s20, 0
    %s23 = sadd.s32 %s22, 1
    %s24 = scalar_select %p21, %s22, %s23
    %p27 = pneg %p21
    %p28 = scmp.eq.s32.totalorder %s12, 1
    %p29 = por %p27, %p28
    %p30 = scmp.ne.s32.totalorder %s22, %s25
    %p31 = scmp.eq.s32.totalorder %s12, 0
    %p32 = por %p30, %p31
    %p33 = scmp.ne.s32.totalorder %s22, %s25
    %p34 = scmp.eq.s32.totalorder %s17, 1
    %p35 = por %p33, %p34
    %p36 = scmp.ne.s32.totalorder %s25, %s26
    %p37 = scmp.eq.s32.totalorder %s17, 0
    %p38 = por %p36, %p37
    %p39 = scmp.ne.s32.totalorder %s25, %s26
    %p40 = scmp.eq.s32.totalorder %s18, 1
    %p41 = por %p39, %p40
    %p43 = scmp.ne.s32.totalorder %s26, %s42
    %p44 = scmp.eq.s32.totalorder %s18, 0
    %p45 = por %p43, %p44
    %s46 = ssub.s32 %s12, %s19
    %p47 = scmp.eq.s32.totalorder %s46, 0
    %s49 = sadd.s32 %s48, 1
    %s50 = scalar_select %p47, %s48, %s49
    %p53 = pneg %p47
    %p54 = scmp.eq.s32.totalorder %s12, 1
    %p55 = por %p53, %p54
    %p56 = scmp.ne.s32.totalorder %s48, %s51
    %p57 = scmp.eq.s32.totalorder %s12, 0
    %p58 = por %p56, %p57
    %p59 = scmp.ne.s32.totalorder %s48, %s51
    %p60 = scmp.eq.s32.totalorder %s17, 1
    %p61 = por %p59, %p60
    %p62 = scmp.ne.s32.totalorder %s51, %s52
    %p63 = scmp.eq.s32.totalorder %s17, 0
    %p64 = por %p62, %p63
    %p65 = scmp.ne.s32.totalorder %s51, %s52
    %p66 = scmp.eq.s32.totalorder %s18, 1
    %p67 = por %p65, %p66
    %p69 = scmp.ne.s32.totalorder %s52, %s68
    %p70 = scmp.eq.s32.totalorder %s18, 0
    %p71 = por %p69, %p70
    %s73 = sadd.s32 %s72, 1
    %p76 = scmp.eq.s32.totalorder %s12, 1
    %p77 = scmp.ne.s32.totalorder %s72, %s74
    %p78 = scmp.eq.s32.totalorder %s12, 0
    %p79 = por %p77, %p78
    %p80 = scmp.ne.s32.totalorder %s72, %s74
    %p81 = scmp.eq.s32.totalorder %s17, 1
    %p82 = por %p80, %p81
    %p83 = scmp.ne.s32.totalorder %s74, %s75
    %p84 = scmp.eq.s32.totalorder %s17, 0
    %p85 = por %p83, %p84
    %p86 = scmp.ne.s32.totalorder %s74, %s75
    %p87 = scmp.eq.s32.totalorder %s18, 1
    %p88 = por %p86, %p87
    %p90 = scmp.ne.s32.totalorder %s75, %s89
    %p91 = scmp.eq.s32.totalorder %s18, 0
    %p92 = por %p90, %p91
    %s94 = sadd.s32 %s93, 1
    %p97 = scmp.eq.s32.totalorder %s12, 1
    %p98 = scmp.ne.s32.totalorder %s93, %s95
    %p99 = scmp.eq.s32.totalorder %s12, 0
    %p100 = por %p98, %p99
    %p101 = scmp.ne.s32.totalorder %s93, %s95
    %p102 = scmp.eq.s32.totalorder %s17, 1
    %p103 = por %p101, %p102
    %p104 = scmp.ne.s32.totalorder %s95, %s96
    %p105 = scmp.eq.s32.totalorder %s17, 0
    %p106 = por %p104, %p105
    %p107 = scmp.ne.s32.totalorder %s95, %s96
    %p108 = scmp.eq.s32.totalorder %s18, 1
    %p109 = por %p107, %p108
    %p111 = scmp.ne.s32.totalorder %s96, %s110
    %p112 = scmp.eq.s32.totalorder %s18, 0
    %p113 = por %p111, %p112
    %s115 = sadd.s32 %s114, 1
    %p118 = scmp.eq.s32.totalorder %s12, 1
    %p119 = scmp.ne.s32.totalorder %s114, %s116
    %p120 = scmp.eq.s32.totalorder %s12, 0
    %p121 = por %p119, %p120
    %p122 = scmp.ne.s32.totalorder %s114, %s116
    %p123 = scmp.eq.s32.totalorder %s17, 1
    %p124 = por %p122, %p123
    %p125 = scmp.ne.s32.totalorder %s116, %s117
    %p126 = scmp.eq.s32.totalorder %s17, 0
    %p127 = por %p125, %p126
    %p128 = scmp.ne.s32.totalorder %s116, %s117
    %p129 = scmp.eq.s32.totalorder %s18, 1
    %p130 = por %p128, %p129
    %p132 = scmp.ne.s32.totalorder %s117, %s131
    %p133 = scmp.eq.s32.totalorder %s18, 0
    %p134 = por %p132, %p133
    %s136 = sadd.s32 %s135, 1
    %p139 = scmp.eq.s32.totalorder %s12, 1
    %p140 = scmp.ne.s32.totalorder %s135, %s137
    %p141 = scmp.eq.s32.totalorder %s12, 0
    %p142 = por %p140, %p141
    %p143 = scmp.ne.s32.totalorder %s135, %s137
    %p144 = scmp.eq.s32.totalorder %s17, 1
    %p145 = por %p143, %p144
    %p146 = scmp.ne.s32.totalorder %s137, %s138
    %p147 = scmp.eq.s32.totalorder %s17, 0
    %p148 = por %p146, %p147
    %p149 = scmp.ne.s32.totalorder %s137, %s138
    %p150 = scmp.eq.s32.totalorder %s18, 1
    %p151 = por %p149, %p150
    %p153 = scmp.ne.s32.totalorder %s138, %s152
    %p154 = scmp.eq.s32.totalorder %s18, 0
    %p155 = por %p153, %p154
    %s156 = ssub.s32 %s12, %s19
    %p157 = scmp.eq.s32.totalorder %s156, 0
    %s159 = sadd.s32 %s158, 1
    %s160 = scalar_select %p157, %s158, %s159
    %p163 = pneg %p157
    %p164 = scmp.eq.s32.totalorder %s12, 1
    %p165 = por %p163, %p164
    %p166 = scmp.ne.s32.totalorder %s158, %s161
    %p167 = scmp.eq.s32.totalorder %s12, 0
    %p168 = por %p166, %p167
    %p169 = scmp.ne.s32.totalorder %s158, %s161
    %p170 = scmp.eq.s32.totalorder %s17, 1
    %p171 = por %p169, %p170
    %p172 = scmp.ne.s32.totalorder %s161, %s162
    %p173 = scmp.eq.s32.totalorder %s17, 0
    %p174 = por %p172, %p173
    %p175 = scmp.ne.s32.totalorder %s161, %s162
    %p176 = scmp.eq.s32.totalorder %s18, 1
    %p177 = por %p175, %p176
    %p179 = scmp.ne.s32.totalorder %s162, %s178
    %p180 = scmp.eq.s32.totalorder %s18, 0
    %p181 = por %p179, %p180
    %p182 = scmp.le.s32.totalorder 1, %s12
    %p183 = scmp.lt.s32.totalorder %s12, 3
    %p184 = pnand %p182, %p183
    %p185 = pneg %p184
    // Predicated region
    $region9: #{gat_layer_forward.1} parent=5 // pred_check
      _
    $region10: #{gat_layer_forward.1} parent=5 // pred_check_branch
      %187 = sbr.rel (%p184) target = $region12
    $region11: #{gat_layer_forward.1} parent=5 // pred_region
      %s188 = ssub.s32 %s12, 1
      // Predicated region
      $region13: #{gat_layer_forward.1} parent=11 // pred_check
        %p189 = pneg %p85
      $region14: #{gat_layer_forward.1} parent=11 // pred_check_branch
        %191 = sbr.rel (%p189) target = $region16
      $region15: #{gat_layer_forward.1} parent=11 // pred_region
        _
      $region16: #{gat_layer_forward.1} parent=11 // pred_fallthru
        _
      // Predicated region
      $region17: #{gat_layer_forward.1} parent=11 // pred_check
        %p192 = pneg %p106
      $region18: #{gat_layer_forward.1} parent=11 // pred_check_branch
        %194 = sbr.rel (%p192) target = $region20
      $region19: #{gat_layer_forward.1} parent=11 // pred_region
        _
      $region20: #{gat_layer_forward.1} parent=11 // pred_fallthru
        _
      // Predicated region
      $region21: #{gat_layer_forward.1} parent=11 // pred_check
        %p195 = pneg %p127
      $region22: #{gat_layer_forward.1} parent=11 // pred_check_branch
        %197 = sbr.rel (%p195) target = $region24
      $region23: #{gat_layer_forward.1} parent=11 // pred_region
        _
      $region24: #{gat_layer_forward.1} parent=11 // pred_fallthru
        _
      // Predicated region
      $region25: #{gat_layer_forward.1} parent=11 // pred_check
        %p198 = pneg %p148
      $region26: #{gat_layer_forward.1} parent=11 // pred_check_branch
        %200 = sbr.rel (%p198) target = $region28
      $region27: #{gat_layer_forward.1} parent=11 // pred_region
        _
      $region28: #{gat_layer_forward.1} parent=11 // pred_fallthru
        _
    $region12: #{gat_layer_forward.1} parent=5 // pred_fallthru
      _
    %p201 = scmp.lt.s32.totalorder %s12, 2
    // Predicated region
    $region29: #{gat_layer_forward.1} parent=5 // pred_check
      %p202 = pneg %p201
    $region30: #{gat_layer_forward.1} parent=5 // pred_check_branch
      %204 = sbr.rel (%p202) target = $region32
    $region31: #{gat_layer_forward.1} parent=5 // pred_region
      // Predicated region
      $region33: #{gat_layer_forward.1} parent=31 // pred_check
        %p205 = pneg %p32
      $region34: #{gat_layer_forward.1} parent=31 // pred_check_branch
        %207 = sbr.rel (%p205) target = $region36
      $region35: #{gat_layer_forward.1} parent=31 // pred_region
        %p208 = scmp.lt.s32.totalorder %s12, 1
        %s209 = scalar_select %p208, %s12, 1
        %s210 = smul.addr %s209, 16
        %s211 = smul.addr %s210, 8
        %s212 = scalar_lea.vmem %s0, %s211
      $region36: #{gat_layer_forward.1} parent=31 // pred_fallthru
        _
      // Predicated region
      $region37: #{gat_layer_forward.1} parent=31 // pred_check
        %p213 = pneg %p58
      $region38: #{gat_layer_forward.1} parent=31 // pred_check_branch
        %215 = sbr.rel (%p213) target = $region40
      $region39: #{gat_layer_forward.1} parent=31 // pred_region
        %p216 = scmp.lt.s32.totalorder %s12, 1
        %s217 = scalar_select %p216, %s12, 1
        %s218 = smul.addr %s217, 16
        %s219 = smul.addr %s218, 8
        %s220 = scalar_lea.vmem %s1, %s219
      $region40: #{gat_layer_forward.1} parent=31 // pred_fallthru
        _
    $region32: #{gat_layer_forward.1} parent=5 // pred_fallthru
      _
    %p221 = scmp.le.s32.totalorder 1, %s12
    %p222 = scmp.lt.s32.totalorder %s12, 3
    %p223 = pnand %p221, %p222
    %p224 = pneg %p223
    // Predicated region
    $region41: #{gat_layer_forward.1} parent=5 // pred_check
      _
    $region42: #{gat_layer_forward.1} parent=5 // pred_check_branch
      %226 = sbr.rel (%p223) target = $region44
    $region43: #{gat_layer_forward.1} parent=5 // pred_region
      %s227 = ssub.s32 %s12, 1
      %p228 = scmp.lt.s32.totalorder %s17, 1
      %s229 = scalar_select %p228, %s17, 1
      %s230 = smul.addr %s229, 16
      %s231 = smul.addr %s230, 8
      %s232 = scalar_lea.vmem %s0, %s231
      %p233 = pneg %p38
      %p234 = pneg %p35
      %p235 = scmp.lt.s32.totalorder %s17, 1
      %s236 = scalar_select %p235, %s17, 1
      %s237 = smul.addr %s236, 16
      %s238 = smul.addr %s237, 8
      %s239 = scalar_lea.vmem %s1, %s238
      %p240 = pneg %p64
      %p241 = pneg %p61
      %p242 = pneg %p85
      %p243 = pneg %p82
      %p244 = pneg %p106
      %p245 = pneg %p103
      %p246 = pneg %p127
      %p247 = pneg %p124
      %p248 = pneg %p148
      %p249 = pneg %p145
      %p250 = pneg %p174
      %p251 = pneg %p171
      %p252 = scmp.lt.s32.totalorder %s17, 1
      %s253 = scalar_select %p252, %s17, 1
      %s254 = smul.addr %s253, 16
      %s255 = smul.addr %s254, 8
      %s256 = scalar_lea.vmem %s6, %s255
      %p257 = scmp.lt.s32.totalorder %s17, 1
      %s258 = scalar_select %p257, %s17, 1
      %s259 = smul.addr %s258, 16
      %s260 = smul.addr %s259, 8
      %s261 = scalar_lea.vmem %s0, %s260
      %p262 = scmp.lt.s32.totalorder %s17, 1
      %s263 = scalar_select %p262, %s17, 1
      %s264 = smul.addr %s263, 16
      %s265 = smul.addr %s264, 8
      %s266 = scalar_lea.vmem %s1, %s265
      %p267 = scmp.lt.s32.totalorder %s17, 1
      %s268 = scalar_select %p267, %s17, 1
      %s269 = smul.addr %s268, 16
      %s270 = smul.addr %s269, 8
      %s271 = scalar_lea.vmem %s6, %s270
      %v272 = vld [vmem:[%s261] sm:$0xff]
      %v273 = vld [vmem:[%s261 + $0x8] sm:$0xff]
      %v274 = vld [vmem:[%s261 + $0x10] sm:$0xff]
      %v275 = vld [vmem:[%s261 + $0x18] sm:$0xff]
      %v276 = vld [vmem:[%s261 + $0x20] sm:$0xff]
      %v277 = vld [vmem:[%s261 + $0x28] sm:$0xff]
      %v278 = vld [vmem:[%s261 + $0x30] sm:$0xff]
      %v279 = vld [vmem:[%s261 + $0x38] sm:$0xff]
      %v280 = vld [vmem:[%s261 + $0x40] sm:$0xff]
      %v281 = vld [vmem:[%s261 + $0x48] sm:$0xff]
      %v282 = vld [vmem:[%s261 + $0x50] sm:$0xff]
      %v283 = vld [vmem:[%s261 + $0x58] sm:$0xff]
      %v284 = vld [vmem:[%s261 + $0x60] sm:$0xff]
      %v285 = vld [vmem:[%s261 + $0x68] sm:$0xff]
      %v286 = vld [vmem:[%s261 + $0x70] sm:$0xff]
      %v287 = vld [vmem:[%s261 + $0x78] sm:$0xff]
      %v288 = vld [vmem:[%s2] sm:$0xff]
      %v289 = vld [vmem:[%s2 + $0x8] sm:$0xff]
      %v290 = vld [vmem:[%s2 + $0x10] sm:$0xff]
      %v291 = vld [vmem:[%s2 + $0x18] sm:$0xff]
      %v292 = vld [vmem:[%s2 + $0x20] sm:$0xff]
      %v293 = vld [vmem:[%s2 + $0x28] sm:$0xff]
      %v294 = vld [vmem:[%s2 + $0x30] sm:$0xff]
      %v295 = vld [vmem:[%s2 + $0x38] sm:$0xff]
      %v296 = vld [vmem:[%s2 + $0x40] sm:$0xff]
      %v297 = vld [vmem:[%s2 + $0x48] sm:$0xff]
      %v298 = vld [vmem:[%s2 + $0x50] sm:$0xff]
      %v299 = vld [vmem:[%s2 + $0x58] sm:$0xff]
      %v300 = vld [vmem:[%s2 + $0x60] sm:$0xff]
      %v301 = vld [vmem:[%s2 + $0x68] sm:$0xff]
      %v302 = vld [vmem:[%s2 + $0x70] sm:$0xff]
      %v303 = vld [vmem:[%s2 + $0x78] sm:$0xff]
      %v304 = vld [vmem:[%s3] sm:$0x1]
      %v306 = vlaneseq
      %v307 = vshrl.u32 %v306, 7
      %v308 = vsub.s32 0, %v307
      %v309 = vrot.slane %v304, %v308
      %311 = vmatprep.subr.mxu0 0.0
      %312 = vmatpush1.msra.mxu0 %v303
      %313 = vmatprep.subr.mxu0 0.0
      %314 = vmatpush1.msra.mxu0 %v302
      %315 = vmatprep.subr.mxu0 0.0
      %316 = vmatpush1.msra.mxu0 %v301
      %317 = vmatprep.subr.mxu0 0.0
      %318 = vmatpush1.msra.mxu0 %v300
      %319 = vmatprep.subr.mxu0 0.0
      %320 = vmatpush1.msra.mxu0 %v299
      %321 = vmatprep.subr.mxu0 0.0
      %322 = vmatpush1.msra.mxu0 %v298
      %323 = vmatprep.subr.mxu0 0.0
      %324 = vmatpush1.msra.mxu0 %v297
      %325 = vmatprep.subr.mxu0 0.0
      %326 = vmatpush1.msra.mxu0 %v296
      %327 = vmatprep.subr.mxu0 0.0
      %328 = vmatpush1.msra.mxu0 %v295
      %329 = vmatprep.subr.mxu0 0.0
      %330 = vmatpush1.msra.mxu0 %v294
      %331 = vmatprep.subr.mxu0 0.0
      %332 = vmatpush1.msra.mxu0 %v293
      %333 = vmatprep.subr.mxu0 0.0
      %334 = vmatpush1.msra.mxu0 %v292
      %335 = vmatprep.subr.mxu0 0.0
      %336 = vmatpush1.msra.mxu0 %v291
      %337 = vmatprep.subr.mxu0 0.0
      %338 = vmatpush1.msra.mxu0 %v290
      %339 = vmatprep.subr.mxu0 0.0
      %340 = vmatpush1.msra.mxu0 %v289
      %341 = vmatprep.subr.mxu0 0.0
      %342 = vmatpush1.msra.mxu0 %v288
      %343 = vmatprep.subr.mxu0 0.0
      %344 = vmatpush2.msra.mxu0 0.0
      %345 = vmatprep.subr.mxu0 0.0
      %346 = vmatpush2.msra.mxu0 0.0
      %347 = vmatprep.subr.mxu0 0.0
      %348 = vmatpush2.msra.mxu0 0.0
      %349 = vmatprep.subr.mxu0 0.0
      %350 = vmatpush2.msra.mxu0 0.0
      %351 = vmatprep.subr.mxu0 0.0
      %352 = vmatpush2.msra.mxu0 0.0
      %353 = vmatprep.subr.mxu0 0.0
      %354 = vmatpush2.msra.mxu0 0.0
      %355 = vmatprep.subr.mxu0 0.0
      %356 = vmatpush2.msra.mxu0 0.0
      %357 = vmatprep.subr.mxu0 0.0
      %358 = vmatpush2.msra.mxu0 0.0
      %359 = vmatprep.subr.mxu0 0.0
      %360 = vmatpush2.msra.mxu0 0.0
      %361 = vmatprep.subr.mxu0 0.0
      %362 = vmatpush2.msra.mxu0 0.0
      %363 = vmatprep.subr.mxu0 0.0
      %364 = vmatpush2.msra.mxu0 0.0
      %365 = vmatprep.subr.mxu0 0.0
      %366 = vmatpush2.msra.mxu0 0.0
      %367 = vmatprep.subr.mxu0 0.0
      %368 = vmatpush2.msra.mxu0 0.0
      %369 = vmatprep.subr.mxu0 0.0
      %370 = vmatpush2.msra.mxu0 0.0
      %371 = vmatprep.subr.mxu0 0.0
      %372 = vmatpush2.msra.mxu0 0.0
      %373 = vmatprep.subr.mxu0 0.0
      %374 = vmatpush2.msra.mxu0 0.0
      %375 = vmatprep.mubr.f32.mxu0 0.0
      %376 = vmatmul.mubr.f32.gmra.mxu0 %v272
      %v377 = vpop.f32.mrf.mxu0
      %v378 = vadd.f32 %v309, %v377
      %v379 = vpop.f32.mrf.mxu0
      %380 = vmatprep.mubr.f32.mxu0 0.0
      %381 = vmatmul.mubr.f32.gmra.mxu0 %v273
      %v382 = vpop.f32.mrf.mxu0
      %v383 = vadd.f32 %v309, %v382
      %v384 = vpop.f32.mrf.mxu0
      %385 = vmatprep.mubr.f32.mxu0 0.0
      %386 = vmatmul.mubr.f32.gmra.mxu0 %v274
      %v387 = vpop.f32.mrf.mxu0
      %v388 = vadd.f32 %v309, %v387
      %v389 = vpop.f32.mrf.mxu0
      %390 = vmatprep.mubr.f32.mxu0 0.0
      %391 = vmatmul.mubr.f32.gmra.mxu0 %v275
      %v392 = vpop.f32.mrf.mxu0
      %v393 = vadd.f32 %v309, %v392
      %v394 = vpop.f32.mrf.mxu0
      %395 = vmatprep.mubr.f32.mxu0 0.0
      %396 = vmatmul.mubr.f32.gmra.mxu0 %v276
      %v397 = vpop.f32.mrf.mxu0
      %v398 = vadd.f32 %v309, %v397
      %v399 = vpop.f32.mrf.mxu0
      %400 = vmatprep.mubr.f32.mxu0 0.0
      %401 = vmatmul.mubr.f32.gmra.mxu0 %v277
      %v402 = vpop.f32.mrf.mxu0
      %v403 = vadd.f32 %v309, %v402
      %v404 = vpop.f32.mrf.mxu0
      %405 = vmatprep.mubr.f32.mxu0 0.0
      %406 = vmatmul.mubr.f32.gmra.mxu0 %v278
      %v407 = vpop.f32.mrf.mxu0
      %v408 = vadd.f32 %v309, %v407
      %v409 = vpop.f32.mrf.mxu0
      %410 = vmatprep.mubr.f32.mxu0 0.0
      %411 = vmatmul.mubr.f32.gmra.mxu0 %v279
      %v412 = vpop.f32.mrf.mxu0
      %v413 = vadd.f32 %v309, %v412
      %v414 = vpop.f32.mrf.mxu0
      %415 = vmatprep.mubr.f32.mxu0 0.0
      %416 = vmatmul.mubr.f32.gmra.mxu0 %v280
      %v417 = vpop.f32.mrf.mxu0
      %v418 = vadd.f32 %v309, %v417
      %v419 = vpop.f32.mrf.mxu0
      %420 = vmatprep.mubr.f32.mxu0 0.0
      %421 = vmatmul.mubr.f32.gmra.mxu0 %v281
      %v422 = vpop.f32.mrf.mxu0
      %v423 = vadd.f32 %v309, %v422
      %v424 = vpop.f32.mrf.mxu0
      %425 = vmatprep.mubr.f32.mxu0 0.0
      %426 = vmatmul.mubr.f32.gmra.mxu0 %v282
      %v427 = vpop.f32.mrf.mxu0
      %v428 = vadd.f32 %v309, %v427
      %v429 = vpop.f32.mrf.mxu0
      %430 = vmatprep.mubr.f32.mxu0 0.0
      %431 = vmatmul.mubr.f32.gmra.mxu0 %v283
      %v432 = vpop.f32.mrf.mxu0
      %v433 = vadd.f32 %v309, %v432
      %v434 = vpop.f32.mrf.mxu0
      %435 = vmatprep.mubr.f32.mxu0 0.0
      %436 = vmatmul.mubr.f32.gmra.mxu0 %v284
      %v437 = vpop.f32.mrf.mxu0
      %v438 = vadd.f32 %v309, %v437
      %v439 = vpop.f32.mrf.mxu0
      %440 = vmatprep.mubr.f32.mxu0 0.0
      %441 = vmatmul.mubr.f32.gmra.mxu0 %v285
      %v442 = vpop.f32.mrf.mxu0
      %v443 = vadd.f32 %v309, %v442
      %v444 = vpop.f32.mrf.mxu0
      %445 = vmatprep.mubr.f32.mxu0 0.0
      %446 = vmatmul.mubr.f32.gmra.mxu0 %v286
      %v447 = vpop.f32.mrf.mxu0
      %v448 = vadd.f32 %v309, %v447
      %v449 = vpop.f32.mrf.mxu0
      %450 = vmatprep.mubr.f32.mxu0 0.0
      %451 = vmatmul.mubr.f32.gmra.mxu0 %v287
      %v452 = vpop.f32.mrf.mxu0
      %v453 = vadd.f32 %v309, %v452
      %v454 = vpop.f32.mrf.mxu0
      %455 = vdwg.mxu0
      %v456 = vld [vmem:[%s4] sm:$0xff]
      %v457 = vld [vmem:[%s4 + $0x8] sm:$0xff]
      %v458 = vld [vmem:[%s4 + $0x10] sm:$0xff]
      %v459 = vld [vmem:[%s4 + $0x18] sm:$0xff]
      %v460 = vld [vmem:[%s4 + $0x20] sm:$0xff]
      %v461 = vld [vmem:[%s4 + $0x28] sm:$0xff]
      %v462 = vld [vmem:[%s4 + $0x30] sm:$0xff]
      %v463 = vld [vmem:[%s4 + $0x38] sm:$0xff]
      %v464 = vld [vmem:[%s4 + $0x40] sm:$0xff]
      %v465 = vld [vmem:[%s4 + $0x48] sm:$0xff]
      %v466 = vld [vmem:[%s4 + $0x50] sm:$0xff]
      %v467 = vld [vmem:[%s4 + $0x58] sm:$0xff]
      %v468 = vld [vmem:[%s4 + $0x60] sm:$0xff]
      %v469 = vld [vmem:[%s4 + $0x68] sm:$0xff]
      %v470 = vld [vmem:[%s4 + $0x70] sm:$0xff]
      %v471 = vld [vmem:[%s4 + $0x78] sm:$0xff]
      %v472 = vld [vmem:[%s5] sm:$0x1]
      %v474 = vlaneseq
      %v475 = vshrl.u32 %v474, 7
      %v476 = vsub.s32 0, %v475
      %v477 = vrot.slane %v472, %v476
      %479 = vmatprep.subr.mxu0 0.0
      %480 = vmatpush1.msra.mxu0 %v471
      %481 = vmatprep.subr.mxu0 0.0
      %482 = vmatpush1.msra.mxu0 %v470
      %483 = vmatprep.subr.mxu0 0.0
      %484 = vmatpush1.msra.mxu0 %v469
      %485 = vmatprep.subr.mxu0 0.0
      %486 = vmatpush1.msra.mxu0 %v468
      %487 = vmatprep.subr.mxu0 0.0
      %488 = vmatpush1.msra.mxu0 %v467
      %489 = vmatprep.subr.mxu0 0.0
      %490 = vmatpush1.msra.mxu0 %v466
      %491 = vmatprep.subr.mxu0 0.0
      %492 = vmatpush1.msra.mxu0 %v465
      %493 = vmatprep.subr.mxu0 0.0
      %494 = vmatpush1.msra.mxu0 %v464
      %495 = vmatprep.subr.mxu0 0.0
      %496 = vmatpush1.msra.mxu0 %v463
      %497 = vmatprep.subr.mxu0 0.0
      %498 = vmatpush1.msra.mxu0 %v462
      %499 = vmatprep.subr.mxu0 0.0
      %500 = vmatpush1.msra.mxu0 %v461
      %501 = vmatprep.subr.mxu0 0.0
      %502 = vmatpush1.msra.mxu0 %v460
      %503 = vmatprep.subr.mxu0 0.0
      %504 = vmatpush1.msra.mxu0 %v459
      %505 = vmatprep.subr.mxu0 0.0
      %506 = vmatpush1.msra.mxu0 %v458
      %507 = vmatprep.subr.mxu0 0.0
      %508 = vmatpush1.msra.mxu0 %v457
      %509 = vmatprep.subr.mxu0 0.0
      %510 = vmatpush1.msra.mxu0 %v456
      %511 = vmatprep.subr.mxu0 0.0
      %512 = vmatpush2.msra.mxu0 0.0
      %513 = vmatprep.subr.mxu0 0.0
      %514 = vmatpush2.msra.mxu0 0.0
      %515 = vmatprep.subr.mxu0 0.0
      %516 = vmatpush2.msra.mxu0 0.0
      %517 = vmatprep.subr.mxu0 0.0
      %518 = vmatpush2.msra.mxu0 0.0
      %519 = vmatprep.subr.mxu0 0.0
      %520 = vmatpush2.msra.mxu0 0.0
      %521 = vmatprep.subr.mxu0 0.0
      %522 = vmatpush2.msra.mxu0 0.0
      %523 = vmatprep.subr.mxu0 0.0
      %524 = vmatpush2.msra.mxu0 0.0
      %525 = vmatprep.subr.mxu0 0.0
      %526 = vmatpush2.msra.mxu0 0.0
      %527 = vmatprep.subr.mxu0 0.0
      %528 = vmatpush2.msra.mxu0 0.0
      %529 = vmatprep.subr.mxu0 0.0
      %530 = vmatpush2.msra.mxu0 0.0
      %531 = vmatprep.subr.mxu0 0.0
      %532 = vmatpush2.msra.mxu0 0.0
      %533 = vmatprep.subr.mxu0 0.0
      %534 = vmatpush2.msra.mxu0 0.0
      %535 = vmatprep.subr.mxu0 0.0
      %536 = vmatpush2.msra.mxu0 0.0
      %537 = vmatprep.subr.mxu0 0.0
      %538 = vmatpush2.msra.mxu0 0.0
      %539 = vmatprep.subr.mxu0 0.0
      %540 = vmatpush2.msra.mxu0 0.0
      %541 = vmatprep.subr.mxu0 0.0
      %542 = vmatpush2.msra.mxu0 0.0
      %543 = vmatprep.mubr.f32.mxu0 0.0
      %544 = vmatmul.mubr.f32.gmra.mxu0 %v272
      %v545 = vpop.f32.mrf.mxu0
      %v546 = vadd.f32 %v477, %v545
      %v547 = vpop.f32.mrf.mxu0
      %548 = vmatprep.mubr.f32.mxu0 0.0
      %549 = vmatmul.mubr.f32.gmra.mxu0 %v273
      %v550 = vpop.f32.mrf.mxu0
      %v551 = vadd.f32 %v477, %v550
      %v552 = vpop.f32.mrf.mxu0
      %553 = vmatprep.mubr.f32.mxu0 0.0
      %554 = vmatmul.mubr.f32.gmra.mxu0 %v274
      %v555 = vpop.f32.mrf.mxu0
      %v556 = vadd.f32 %v477, %v555
      %v557 = vpop.f32.mrf.mxu0
      %558 = vmatprep.mubr.f32.mxu0 0.0
      %559 = vmatmul.mubr.f32.gmra.mxu0 %v275
      %v560 = vpop.f32.mrf.mxu0
      %v561 = vadd.f32 %v477, %v560
      %v562 = vpop.f32.mrf.mxu0
      %563 = vmatprep.mubr.f32.mxu0 0.0
      %564 = vmatmul.mubr.f32.gmra.mxu0 %v276
      %v565 = vpop.f32.mrf.mxu0
      %v566 = vadd.f32 %v477, %v565
      %v567 = vpop.f32.mrf.mxu0
      %568 = vmatprep.mubr.f32.mxu0 0.0
      %569 = vmatmul.mubr.f32.gmra.mxu0 %v277
      %v570 = vpop.f32.mrf.mxu0
      %v571 = vadd.f32 %v477, %v570
      %v572 = vpop.f32.mrf.mxu0
      %573 = vmatprep.mubr.f32.mxu0 0.0
      %574 = vmatmul.mubr.f32.gmra.mxu0 %v278
      %v575 = vpop.f32.mrf.mxu0
      %v576 = vadd.f32 %v477, %v575
      %v577 = vpop.f32.mrf.mxu0
      %578 = vmatprep.mubr.f32.mxu0 0.0
      %579 = vmatmul.mubr.f32.gmra.mxu0 %v279
      %v580 = vpop.f32.mrf.mxu0
      %v581 = vadd.f32 %v477, %v580
      %v582 = vpop.f32.mrf.mxu0
      %583 = vmatprep.mubr.f32.mxu0 0.0
      %584 = vmatmul.mubr.f32.gmra.mxu0 %v280
      %v585 = vpop.f32.mrf.mxu0
      %v586 = vadd.f32 %v477, %v585
      %v587 = vpop.f32.mrf.mxu0
      %588 = vmatprep.mubr.f32.mxu0 0.0
      %589 = vmatmul.mubr.f32.gmra.mxu0 %v281
      %v590 = vpop.f32.mrf.mxu0
      %v591 = vadd.f32 %v477, %v590
      %v592 = vpop.f32.mrf.mxu0
      %593 = vmatprep.mubr.f32.mxu0 0.0
      %594 = vmatmul.mubr.f32.gmra.mxu0 %v282
      %v595 = vpop.f32.mrf.mxu0
      %v596 = vadd.f32 %v477, %v595
      %v597 = vpop.f32.mrf.mxu0
      %598 = vmatprep.mubr.f32.mxu0 0.0
      %599 = vmatmul.mubr.f32.gmra.mxu0 %v283
      %v600 = vpop.f32.mrf.mxu0
      %v601 = vadd.f32 %v477, %v600
      %v602 = vpop.f32.mrf.mxu0
      %603 = vmatprep.mubr.f32.mxu0 0.0
      %604 = vmatmul.mubr.f32.gmra.mxu0 %v284
      %v605 = vpop.f32.mrf.mxu0
      %v606 = vadd.f32 %v477, %v605
      %v607 = vpop.f32.mrf.mxu0
      %608 = vmatprep.mubr.f32.mxu0 0.0
      %609 = vmatmul.mubr.f32.gmra.mxu0 %v285
      %v610 = vpop.f32.mrf.mxu0
      %v611 = vadd.f32 %v477, %v610
      %v612 = vpop.f32.mrf.mxu0
      %613 = vmatprep.mubr.f32.mxu0 0.0
      %614 = vmatmul.mubr.f32.gmra.mxu0 %v286
      %v615 = vpop.f32.mrf.mxu0
      %v616 = vadd.f32 %v477, %v615
      %v617 = vpop.f32.mrf.mxu0
      %618 = vmatprep.mubr.f32.mxu0 0.0
      %619 = vmatmul.mubr.f32.gmra.mxu0 %v287
      %v620 = vpop.f32.mrf.mxu0
      %v621 = vadd.f32 %v477, %v620
      %v622 = vpop.f32.mrf.mxu0
      %623 = vdwg.mxu0
      %v624 = vmul.f32 %v546, 0.5
      %v625 = vmul.f32 %v551, 0.5
      %v626 = vmul.f32 %v556, 0.5
      %v627 = vmul.f32 %v561, 0.5
      %v628 = vmul.f32 %v566, 0.5
      %v629 = vmul.f32 %v571, 0.5
      %v630 = vmul.f32 %v576, 0.5
      %v631 = vmul.f32 %v581, 0.5
      %v632 = vmul.f32 %v586, 0.5
      %v633 = vmul.f32 %v591, 0.5
      %v634 = vmul.f32 %v596, 0.5
      %v635 = vmul.f32 %v601, 0.5
      %v636 = vmul.f32 %v606, 0.5
      %v637 = vmul.f32 %v611, 0.5
      %v638 = vmul.f32 %v616, 0.5
      %v639 = vmul.f32 %v621, 0.5
      %v640 = vmul.f32 %v546, 0.044715
      %v641 = vmul.f32 %v551, 0.044715
      %v642 = vmul.f32 %v556, 0.044715
      %v643 = vmul.f32 %v561, 0.044715
      %v644 = vmul.f32 %v566, 0.044715
      %v645 = vmul.f32 %v571, 0.044715
      %v646 = vmul.f32 %v576, 0.044715
      %v647 = vmul.f32 %v581, 0.044715
      %v648 = vmul.f32 %v586, 0.044715
      %v649 = vmul.f32 %v591, 0.044715
      %v650 = vmul.f32 %v596, 0.044715
      %v651 = vmul.f32 %v601, 0.044715
      %v652 = vmul.f32 %v606, 0.044715
      %v653 = vmul.f32 %v611, 0.044715
      %v654 = vmul.f32 %v616, 0.044715
      %v655 = vmul.f32 %v621, 0.044715
      %v656 = vmul.f32 %v640, %v546
      %v657 = vmul.f32 %v641, %v551
      %v658 = vmul.f32 %v642, %v556
      %v659 = vmul.f32 %v643, %v561
      %v660 = vmul.f32 %v644, %v566
      %v661 = vmul.f32 %v645, %v571
      %v662 = vmul.f32 %v646, %v576
      %v663 = vmul.f32 %v647, %v581
      %v664 = vmul.f32 %v648, %v586
      %v665 = vmul.f32 %v649, %v591
      %v666 = vmul.f32 %v650, %v596
      %v667 = vmul.f32 %v651, %v601
      %v668 = vmul.f32 %v652, %v606
      %v669 = vmul.f32 %v653, %v611
      %v670 = vmul.f32 %v654, %v616
      %v671 = vmul.f32 %v655, %v621
      %v672 = vmul.f32 %v656, %v546
      %v673 = vmul.f32 %v657, %v551
      %v674 = vmul.f32 %v658, %v556
      %v675 = vmul.f32 %v659, %v561
      %v676 = vmul.f32 %v660, %v566
      %v677 = vmul.f32 %v661, %v571
      %v678 = vmul.f32 %v662, %v576
      %v679 = vmul.f32 %v663, %v581
      %v680 = vmul.f32 %v664, %v586
      %v681 = vmul.f32 %v665, %v591
      %v682 = vmul.f32 %v666, %v596
      %v683 = vmul.f32 %v667, %v601
      %v684 = vmul.f32 %v668, %v606
      %v685 = vmul.f32 %v669, %v611
      %v686 = vmul.f32 %v670, %v616
      %v687 = vmul.f32 %v671, %v621
      %v688 = vadd.f32 %v546, %v672
      %v689 = vadd.f32 %v551, %v673
      %v690 = vadd.f32 %v556, %v674
      %v691 = vadd.f32 %v561, %v675
      %v692 = vadd.f32 %v566, %v676
      %v693 = vadd.f32 %v571, %v677
      %v694 = vadd.f32 %v576, %v678
      %v695 = vadd.f32 %v581, %v679
      %v696 = vadd.f32 %v586, %v680
      %v697 = vadd.f32 %v591, %v681
      %v698 = vadd.f32 %v596, %v682
      %v699 = vadd.f32 %v601, %v683
      %v700 = vadd.f32 %v606, %v684
      %v701 = vadd.f32 %v611, %v685
      %v702 = vadd.f32 %v616, %v686
      %v703 = vadd.f32 %v621, %v687
      %v704 = vmul.f32 %v688, 0.7978846
      %v705 = vmul.f32 %v689, 0.7978846
      %v706 = vmul.f32 %v690, 0.7978846
      %v707 = vmul.f32 %v691, 0.7978846
      %v708 = vmul.f32 %v692, 0.7978846
      %v709 = vmul.f32 %v693, 0.7978846
      %v710 = vmul.f32 %v694, 0.7978846
      %v711 = vmul.f32 %v695, 0.7978846
      %v712 = vmul.f32 %v696, 0.7978846
      %v713 = vmul.f32 %v697, 0.7978846
      %v714 = vmul.f32 %v698, 0.7978846
      %v715 = vmul.f32 %v699, 0.7978846
      %v716 = vmul.f32 %v700, 0.7978846
      %v717 = vmul.f32 %v701, 0.7978846
      %v718 = vmul.f32 %v702, 0.7978846
      %v719 = vmul.f32 %v703, 0.7978846
      %v720 = vtanh.pop %v704
      %v721 = vtanh.pop %v705
      %v722 = vtanh.pop %v706
      %v723 = vtanh.pop %v707
      %v724 = vtanh.pop %v708
      %v725 = vtanh.pop %v709
      %v726 = vtanh.pop %v710
      %v727 = vtanh.pop %v711
      %v728 = vtanh.pop %v712
      %v729 = vtanh.pop %v713
      %v730 = vtanh.pop %v714
      %v731 = vtanh.pop %v715
      %v732 = vtanh.pop %v716
      %v733 = vtanh.pop %v717
      %v734 = vtanh.pop %v718
      %v735 = vtanh.pop %v719
      %v736 = vadd.f32 %v720, 1.0
      %v737 = vadd.f32 %v721, 1.0
      %v738 = vadd.f32 %v722, 1.0
      %v739 = vadd.f32 %v723, 1.0
      %v740 = vadd.f32 %v724, 1.0
      %v741 = vadd.f32 %v725, 1.0
      %v742 = vadd.f32 %v726, 1.0
      %v743 = vadd.f32 %v727, 1.0
      %v744 = vadd.f32 %v728, 1.0
      %v745 = vadd.f32 %v729, 1.0
      %v746 = vadd.f32 %v730, 1.0
      %v747 = vadd.f32 %v731, 1.0
      %v748 = vadd.f32 %v732, 1.0
      %v749 = vadd.f32 %v733, 1.0
      %v750 = vadd.f32 %v734, 1.0
      %v751 = vadd.f32 %v735, 1.0
      %v752 = vmul.f32 %v624, %v736
      %v753 = vmul.f32 %v625, %v737
      %v754 = vmul.f32 %v626, %v738
      %v755 = vmul.f32 %v627, %v739
      %v756 = vmul.f32 %v628, %v740
      %v757 = vmul.f32 %v629, %v741
      %v758 = vmul.f32 %v630, %v742
      %v759 = vmul.f32 %v631, %v743
      %v760 = vmul.f32 %v632, %v744
      %v761 = vmul.f32 %v633, %v745
      %v762 = vmul.f32 %v634, %v746
      %v763 = vmul.f32 %v635, %v747
      %v764 = vmul.f32 %v636, %v748
      %v765 = vmul.f32 %v637, %v749
      %v766 = vmul.f32 %v638, %v750
      %v767 = vmul.f32 %v639, %v751
      %768 = vmatprep.subr.mxu0 0.0
      %769 = vmatpush1.xpose.msra.mxu0 %v453
      %770 = vmatprep.subr.mxu0 0.0
      %771 = vmatpush1.xpose.msra.mxu0 %v448
      %772 = vmatprep.subr.mxu0 0.0
      %773 = vmatpush1.xpose.msra.mxu0 %v443
      %774 = vmatprep.subr.mxu0 0.0
      %775 = vmatpush1.xpose.msra.mxu0 %v438
      %776 = vmatprep.subr.mxu0 0.0
      %777 = vmatpush1.xpose.msra.mxu0 %v433
      %778 = vmatprep.subr.mxu0 0.0
      %779 = vmatpush1.xpose.msra.mxu0 %v428
      %780 = vmatprep.subr.mxu0 0.0
      %781 = vmatpush1.xpose.msra.mxu0 %v423
      %782 = vmatprep.subr.mxu0 0.0
      %783 = vmatpush1.xpose.msra.mxu0 %v418
      %784 = vmatprep.subr.mxu0 0.0
      %785 = vmatpush1.xpose.msra.mxu0 %v413
      %786 = vmatprep.subr.mxu0 0.0
      %787 = vmatpush1.xpose.msra.mxu0 %v408
      %788 = vmatprep.subr.mxu0 0.0
      %789 = vmatpush1.xpose.msra.mxu0 %v403
      %790 = vmatprep.subr.mxu0 0.0
      %791 = vmatpush1.xpose.msra.mxu0 %v398
      %792 = vmatprep.subr.mxu0 0.0
      %793 = vmatpush1.xpose.msra.mxu0 %v393
      %794 = vmatprep.subr.mxu0 0.0
      %795 = vmatpush1.xpose.msra.mxu0 %v388
      %796 = vmatprep.subr.mxu0 0.0
      %797 = vmatpush1.xpose.msra.mxu0 %v383
      %798 = vmatprep.subr.mxu0 0.0
      %799 = vmatpush1.xpose.msra.mxu0 %v378
      %800 = vmatprep.subr.mxu0 0.0
      %801 = vmatpush2.xpose.msra.mxu0 0.0
      %802 = vmatprep.subr.mxu0 0.0
      %803 = vmatpush2.xpose.msra.mxu0 0.0
      %804 = vmatprep.subr.mxu0 0.0
      %805 = vmatpush2.xpose.msra.mxu0 0.0
      %806 = vmatprep.subr.mxu0 0.0
      %807 = vmatpush2.xpose.msra.mxu0 0.0
      %808 = vmatprep.subr.mxu0 0.0
      %809 = vmatpush2.xpose.msra.mxu0 0.0
      %810 = vmatprep.subr.mxu0 0.0
      %811 = vmatpush2.xpose.msra.mxu0 0.0
      %812 = vmatprep.subr.mxu0 0.0
      %813 = vmatpush2.xpose.msra.mxu0 0.0
      %814 = vmatprep.subr.mxu0 0.0
      %815 = vmatpush2.xpose.msra.mxu0 0.0
      %816 = vmatprep.subr.mxu0 0.0
      %817 = vmatpush2.xpose.msra.mxu0 0.0
      %818 = vmatprep.subr.mxu0 0.0
      %819 = vmatpush2.xpose.msra.mxu0 0.0
      %820 = vmatprep.subr.mxu0 0.0
      %821 = vmatpush2.xpose.msra.mxu0 0.0
      %822 = vmatprep.subr.mxu0 0.0
      %823 = vmatpush2.xpose.msra.mxu0 0.0
      %824 = vmatprep.subr.mxu0 0.0
      %825 = vmatpush2.xpose.msra.mxu0 0.0
      %826 = vmatprep.subr.mxu0 0.0
      %827 = vmatpush2.xpose.msra.mxu0 0.0
      %828 = vmatprep.subr.mxu0 0.0
      %829 = vmatpush2.xpose.msra.mxu0 0.0
      %830 = vmatprep.subr.mxu0 0.0
      %831 = vmatpush2.xpose.msra.mxu0 0.0
      %832 = vmatprep.mubr.f32.mxu0 0.0
      %833 = vmatmul.mubr.f32.gmra.mxu0 %v378
      %v834 = vpop.f32.mrf.mxu0
      %v835 = vadd.f32 0.0, %v834
      %v836 = vpop.f32.mrf.mxu0
      %837 = vmatprep.mubr.f32.mxu0 0.0
      %838 = vmatmul.mubr.f32.gmra.mxu0 %v383
      %v839 = vpop.f32.mrf.mxu0
      %v840 = vadd.f32 0.0, %v839
      %v841 = vpop.f32.mrf.mxu0
      %842 = vmatprep.mubr.f32.mxu0 0.0
      %843 = vmatmul.mubr.f32.gmra.mxu0 %v388
      %v844 = vpop.f32.mrf.mxu0
      %v845 = vadd.f32 0.0, %v844
      %v846 = vpop.f32.mrf.mxu0
      %847 = vmatprep.mubr.f32.mxu0 0.0
      %848 = vmatmul.mubr.f32.gmra.mxu0 %v393
      %v849 = vpop.f32.mrf.mxu0
      %v850 = vadd.f32 0.0, %v849
      %v851 = vpop.f32.mrf.mxu0
      %852 = vmatprep.mubr.f32.mxu0 0.0
      %853 = vmatmul.mubr.f32.gmra.mxu0 %v398
      %v854 = vpop.f32.mrf.mxu0
      %v855 = vadd.f32 0.0, %v854
      %v856 = vpop.f32.mrf.mxu0
      %857 = vmatprep.mubr.f32.mxu0 0.0
      %858 = vmatmul.mubr.f32.gmra.mxu0 %v403
      %v859 = vpop.f32.mrf.mxu0
      %v860 = vadd.f32 0.0, %v859
      %v861 = vpop.f32.mrf.mxu0
      %862 = vmatprep.mubr.f32.mxu0 0.0
      %863 = vmatmul.mubr.f32.gmra.mxu0 %v408
      %v864 = vpop.f32.mrf.mxu0
      %v865 = vadd.f32 0.0, %v864
      %v866 = vpop.f32.mrf.mxu0
      %867 = vmatprep.mubr.f32.mxu0 0.0
      %868 = vmatmul.mubr.f32.gmra.mxu0 %v413
      %v869 = vpop.f32.mrf.mxu0
      %v870 = vadd.f32 0.0, %v869
      %v871 = vpop.f32.mrf.mxu0
      %872 = vmatprep.mubr.f32.mxu0 0.0
      %873 = vmatmul.mubr.f32.gmra.mxu0 %v418
      %v874 = vpop.f32.mrf.mxu0
      %v875 = vadd.f32 0.0, %v874
      %v876 = vpop.f32.mrf.mxu0
      %877 = vmatprep.mubr.f32.mxu0 0.0
      %878 = vmatmul.mubr.f32.gmra.mxu0 %v423
      %v879 = vpop.f32.mrf.mxu0
      %v880 = vadd.f32 0.0, %v879
      %v881 = vpop.f32.mrf.mxu0
      %882 = vmatprep.mubr.f32.mxu0 0.0
      %883 = vmatmul.mubr.f32.gmra.mxu0 %v428
      %v884 = vpop.f32.mrf.mxu0
      %v885 = vadd.f32 0.0, %v884
      %v886 = vpop.f32.mrf.mxu0
      %887 = vmatprep.mubr.f32.mxu0 0.0
      %888 = vmatmul.mubr.f32.gmra.mxu0 %v433
      %v889 = vpop.f32.mrf.mxu0
      %v890 = vadd.f32 0.0, %v889
      %v891 = vpop.f32.mrf.mxu0
      %892 = vmatprep.mubr.f32.mxu0 0.0
      %893 = vmatmul.mubr.f32.gmra.mxu0 %v438
      %v894 = vpop.f32.mrf.mxu0
      %v895 = vadd.f32 0.0, %v894
      %v896 = vpop.f32.mrf.mxu0
      %897 = vmatprep.mubr.f32.mxu0 0.0
      %898 = vmatmul.mubr.f32.gmra.mxu0 %v443
      %v899 = vpop.f32.mrf.mxu0
      %v900 = vadd.f32 0.0, %v899
      %v901 = vpop.f32.mrf.mxu0
      %902 = vmatprep.mubr.f32.mxu0 0.0
      %903 = vmatmul.mubr.f32.gmra.mxu0 %v448
      %v904 = vpop.f32.mrf.mxu0
      %v905 = vadd.f32 0.0, %v904
      %v906 = vpop.f32.mrf.mxu0
      %907 = vmatprep.mubr.f32.mxu0 0.0
      %908 = vmatmul.mubr.f32.gmra.mxu0 %v453
      %v909 = vpop.f32.mrf.mxu0
      %v910 = vadd.f32 0.0, %v909
      %v911 = vpop.f32.mrf.mxu0
      %912 = vdwg.mxu0
      %v913 = vmul.f32 %v835, 0.17677669
      %v914 = vmul.f32 %v840, 0.17677669
      %v915 = vmul.f32 %v845, 0.17677669
      %v916 = vmul.f32 %v850, 0.17677669
      %v917 = vmul.f32 %v855, 0.17677669
      %v918 = vmul.f32 %v860, 0.17677669
      %v919 = vmul.f32 %v865, 0.17677669
      %v920 = vmul.f32 %v870, 0.17677669
      %v921 = vmul.f32 %v875, 0.17677669
      %v922 = vmul.f32 %v880, 0.17677669
      %v923 = vmul.f32 %v885, 0.17677669
      %v924 = vmul.f32 %v890, 0.17677669
      %v925 = vmul.f32 %v895, 0.17677669
      %v926 = vmul.f32 %v900, 0.17677669
      %v927 = vmul.f32 %v905, 0.17677669
      %v928 = vmul.f32 %v910, 0.17677669
      %v929 = vsub.f32 0.0, %v913
      %v930 = vsub.f32 0.0, %v914
      %v931 = vsub.f32 0.0, %v915
      %v932 = vsub.f32 0.0, %v916
      %v933 = vsub.f32 0.0, %v917
      %v934 = vsub.f32 0.0, %v918
      %v935 = vsub.f32 0.0, %v919
      %v936 = vsub.f32 0.0, %v920
      %v937 = vsub.f32 0.0, %v921
      %v938 = vsub.f32 0.0, %v922
      %v939 = vsub.f32 0.0, %v923
      %v940 = vsub.f32 0.0, %v924
      %v941 = vsub.f32 0.0, %v925
      %v942 = vsub.f32 0.0, %v926
      %v943 = vsub.f32 0.0, %v927
      %v944 = vsub.f32 0.0, %v928
      %v945 = vmul.f32 %v929, 1.442695
      %v946 = vpow.pop %v945
      %v947 = vmul.f32 %v930, 1.442695
      %v948 = vpow.pop %v947
      %v949 = vmul.f32 %v931, 1.442695
      %v950 = vpow.pop %v949
      %v951 = vmul.f32 %v932, 1.442695
      %v952 = vpow.pop %v951
      %v953 = vmul.f32 %v933, 1.442695
      %v954 = vpow.pop %v953
      %v955 = vmul.f32 %v934, 1.442695
      %v956 = vpow.pop %v955
      %v957 = vmul.f32 %v935, 1.442695
      %v958 = vpow.pop %v957
      %v959 = vmul.f32 %v936, 1.442695
      %v960 = vpow.pop %v959
      %v961 = vmul.f32 %v937, 1.442695
      %v962 = vpow.pop %v961
      %v963 = vmul.f32 %v938, 1.442695
      %v964 = vpow.pop %v963
      %v965 = vmul.f32 %v939, 1.442695
      %v966 = vpow.pop %v965
      %v967 = vmul.f32 %v940, 1.442695
      %v968 = vpow.pop %v967
      %v969 = vmul.f32 %v941, 1.442695
      %v970 = vpow.pop %v969
      %v971 = vmul.f32 %v942, 1.442695
      %v972 = vpow.pop %v971
      %v973 = vmul.f32 %v943, 1.442695
      %v974 = vpow.pop %v973
      %v975 = vmul.f32 %v944, 1.442695
      %v976 = vpow.pop %v975
      %v977 = vadd.f32 %v946, 1.0
      %v978 = vadd.f32 %v948, 1.0
      %v979 = vadd.f32 %v950, 1.0
      %v980 = vadd.f32 %v952, 1.0
      %v981 = vadd.f32 %v954, 1.0
      %v982 = vadd.f32 %v956, 1.0
      %v983 = vadd.f32 %v958, 1.0
      %v984 = vadd.f32 %v960, 1.0
      %v985 = vadd.f32 %v962, 1.0
      %v986 = vadd.f32 %v964, 1.0
      %v987 = vadd.f32 %v966, 1.0
      %v988 = vadd.f32 %v968, 1.0
      %v989 = vadd.f32 %v970, 1.0
      %v990 = vadd.f32 %v972, 1.0
      %v991 = vadd.f32 %v974, 1.0
      %v992 = vadd.f32 %v976, 1.0
      %v993 = vrcp.pop %v977
      %v994 = vmul.f32 1.0, %v993
      %v995 = vrcp.pop %v978
      %v996 = vmul.f32 1.0, %v995
      %v997 = vrcp.pop %v979
      %v998 = vmul.f32 1.0, %v997
      %v999 = vrcp.pop %v980
      %v1000 = vmul.f32 1.0, %v999
      %v1001 = vrcp.pop %v981
      %v1002 = vmul.f32 1.0, %v1001
      %v1003 = vrcp.pop %v982
      %v1004 = vmul.f32 1.0, %v1003
      %v1005 = vrcp.pop %v983
      %v1006 = vmul.f32 1.0, %v1005
      %v1007 = vrcp.pop %v984
      %v1008 = vmul.f32 1.0, %v1007
      %v1009 = vrcp.pop %v985
      %v1010 = vmul.f32 1.0, %v1009
      %v1011 = vrcp.pop %v986
      %v1012 = vmul.f32 1.0, %v1011
      %v1013 = vrcp.pop %v987
      %v1014 = vmul.f32 1.0, %v1013
      %v1015 = vrcp.pop %v988
      %v1016 = vmul.f32 1.0, %v1015
      %v1017 = vrcp.pop %v989
      %v1018 = vmul.f32 1.0, %v1017
      %v1019 = vrcp.pop %v990
      %v1020 = vmul.f32 1.0, %v1019
      %v1021 = vrcp.pop %v991
      %v1022 = vmul.f32 1.0, %v1021
      %v1023 = vrcp.pop %v992
      %v1024 = vmul.f32 1.0, %v1023
      %v1025 = vld [vmem:[%s266] sm:$0xff]
      %v1026 = vld [vmem:[%s266 + $0x8] sm:$0xff]
      %v1027 = vld [vmem:[%s266 + $0x10] sm:$0xff]
      %v1028 = vld [vmem:[%s266 + $0x18] sm:$0xff]
      %v1029 = vld [vmem:[%s266 + $0x20] sm:$0xff]
      %v1030 = vld [vmem:[%s266 + $0x28] sm:$0xff]
      %v1031 = vld [vmem:[%s266 + $0x30] sm:$0xff]
      %v1032 = vld [vmem:[%s266 + $0x38] sm:$0xff]
      %v1033 = vld [vmem:[%s266 + $0x40] sm:$0xff]
      %v1034 = vld [vmem:[%s266 + $0x48] sm:$0xff]
      %v1035 = vld [vmem:[%s266 + $0x50] sm:$0xff]
      %v1036 = vld [vmem:[%s266 + $0x58] sm:$0xff]
      %v1037 = vld [vmem:[%s266 + $0x60] sm:$0xff]
      %v1038 = vld [vmem:[%s266 + $0x68] sm:$0xff]
      %v1039 = vld [vmem:[%s266 + $0x70] sm:$0xff]
      %v1040 = vld [vmem:[%s266 + $0x78] sm:$0xff]
      %v1041 = vmul.f32 %v994, %v1025
      %v1042 = vmul.f32 %v996, %v1026
      %v1043 = vmul.f32 %v998, %v1027
      %v1044 = vmul.f32 %v1000, %v1028
      %v1045 = vmul.f32 %v1002, %v1029
      %v1046 = vmul.f32 %v1004, %v1030
      %v1047 = vmul.f32 %v1006, %v1031
      %v1048 = vmul.f32 %v1008, %v1032
      %v1049 = vmul.f32 %v1010, %v1033
      %v1050 = vmul.f32 %v1012, %v1034
      %v1051 = vmul.f32 %v1014, %v1035
      %v1052 = vmul.f32 %v1016, %v1036
      %v1053 = vmul.f32 %v1018, %v1037
      %v1054 = vmul.f32 %v1020, %v1038
      %v1055 = vmul.f32 %v1022, %v1039
      %v1056 = vmul.f32 %v1024, %v1040
      %1057 = vmatprep.subr.mxu0 0.0
      %1058 = vmatpush1.msra.mxu0 %v767
      %1059 = vmatprep.subr.mxu0 0.0
      %1060 = vmatpush1.msra.mxu0 %v766
      %1061 = vmatprep.subr.mxu0 0.0
      %1062 = vmatpush1.msra.mxu0 %v765
      %1063 = vmatprep.subr.mxu0 0.0
      %1064 = vmatpush1.msra.mxu0 %v764
      %1065 = vmatprep.subr.mxu0 0.0
      %1066 = vmatpush1.msra.mxu0 %v763
      %1067 = vmatprep.subr.mxu0 0.0
      %1068 = vmatpush1.msra.mxu0 %v762
      %1069 = vmatprep.subr.mxu0 0.0
      %1070 = vmatpush1.msra.mxu0 %v761
      %1071 = vmatprep.subr.mxu0 0.0
      %1072 = vmatpush1.msra.mxu0 %v760
      %1073 = vmatprep.subr.mxu0 0.0
      %1074 = vmatpush1.msra.mxu0 %v759
      %1075 = vmatprep.subr.mxu0 0.0
      %1076 = vmatpush1.msra.mxu0 %v758
      %1077 = vmatprep.subr.mxu0 0.0
      %1078 = vmatpush1.msra.mxu0 %v757
      %1079 = vmatprep.subr.mxu0 0.0
      %1080 = vmatpush1.msra.mxu0 %v756
      %1081 = vmatprep.subr.mxu0 0.0
      %1082 = vmatpush1.msra.mxu0 %v755
      %1083 = vmatprep.subr.mxu0 0.0
      %1084 = vmatpush1.msra.mxu0 %v754
      %1085 = vmatprep.subr.mxu0 0.0
      %1086 = vmatpush1.msra.mxu0 %v753
      %1087 = vmatprep.subr.mxu0 0.0
      %1088 = vmatpush1.msra.mxu0 %v752
      %1089 = vmatprep.subr.mxu0 0.0
      %1090 = vmatpush2.msra.mxu0 0.0
      %1091 = vmatprep.subr.mxu0 0.0
      %1092 = vmatpush2.msra.mxu0 0.0
      %1093 = vmatprep.subr.mxu0 0.0
      %1094 = vmatpush2.msra.mxu0 0.0
      %1095 = vmatprep.subr.mxu0 0.0
      %1096 = vmatpush2.msra.mxu0 0.0
      %1097 = vmatprep.subr.mxu0 0.0
      %1098 = vmatpush2.msra.mxu0 0.0
      %1099 = vmatprep.subr.mxu0 0.0
      %1100 = vmatpush2.msra.mxu0 0.0
      %1101 = vmatprep.subr.mxu0 0.0
      %1102 = vmatpush2.msra.mxu0 0.0
      %1103 = vmatprep.subr.mxu0 0.0
      %1104 = vmatpush2.msra.mxu0 0.0
      %1105 = vmatprep.subr.mxu0 0.0
      %1106 = vmatpush2.msra.mxu0 0.0
      %1107 = vmatprep.subr.mxu0 0.0
      %1108 = vmatpush2.msra.mxu0 0.0
      %1109 = vmatprep.subr.mxu0 0.0
      %1110 = vmatpush2.msra.mxu0 0.0
      %1111 = vmatprep.subr.mxu0 0.0
      %1112 = vmatpush2.msra.mxu0 0.0
      %1113 = vmatprep.subr.mxu0 0.0
      %1114 = vmatpush2.msra.mxu0 0.0
      %1115 = vmatprep.subr.mxu0 0.0
      %1116 = vmatpush2.msra.mxu0 0.0
      %1117 = vmatprep.subr.mxu0 0.0
      %1118 = vmatpush2.msra.mxu0 0.0
      %1119 = vmatprep.subr.mxu0 0.0
      %1120 = vmatpush2.msra.mxu0 0.0
      %1121 = vmatprep.mubr.f32.mxu0 0.0
      %1122 = vmatmul.mubr.f32.gmra.mxu0 %v1041
      %v1123 = vpop.f32.mrf.mxu0
      %v1124 = vadd.f32 0.0, %v1123
      %v1125 = vpop.f32.mrf.mxu0
      %1126 = vmatprep.mubr.f32.mxu0 0.0
      %1127 = vmatmul.mubr.f32.gmra.mxu0 %v1042
      %v1128 = vpop.f32.mrf.mxu0
      %v1129 = vadd.f32 0.0, %v1128
      %v1130 = vpop.f32.mrf.mxu0
      %1131 = vmatprep.mubr.f32.mxu0 0.0
      %1132 = vmatmul.mubr.f32.gmra.mxu0 %v1043
      %v1133 = vpop.f32.mrf.mxu0
      %v1134 = vadd.f32 0.0, %v1133
      %v1135 = vpop.f32.mrf.mxu0
      %1136 = vmatprep.mubr.f32.mxu0 0.0
      %1137 = vmatmul.mubr.f32.gmra.mxu0 %v1044
      %v1138 = vpop.f32.mrf.mxu0
      %v1139 = vadd.f32 0.0, %v1138
      %v1140 = vpop.f32.mrf.mxu0
      %1141 = vmatprep.mubr.f32.mxu0 0.0
      %1142 = vmatmul.mubr.f32.gmra.mxu0 %v1045
      %v1143 = vpop.f32.mrf.mxu0
      %v1144 = vadd.f32 0.0, %v1143
      %v1145 = vpop.f32.mrf.mxu0
      %1146 = vmatprep.mubr.f32.mxu0 0.0
      %1147 = vmatmul.mubr.f32.gmra.mxu0 %v1046
      %v1148 = vpop.f32.mrf.mxu0
      %v1149 = vadd.f32 0.0, %v1148
      %v1150 = vpop.f32.mrf.mxu0
      %1151 = vmatprep.mubr.f32.mxu0 0.0
      %1152 = vmatmul.mubr.f32.gmra.mxu0 %v1047
      %v1153 = vpop.f32.mrf.mxu0
      %v1154 = vadd.f32 0.0, %v1153
      %v1155 = vpop.f32.mrf.mxu0
      %1156 = vmatprep.mubr.f32.mxu0 0.0
      %1157 = vmatmul.mubr.f32.gmra.mxu0 %v1048
      %v1158 = vpop.f32.mrf.mxu0
      %v1159 = vadd.f32 0.0, %v1158
      %v1160 = vpop.f32.mrf.mxu0
      %1161 = vmatprep.mubr.f32.mxu0 0.0
      %1162 = vmatmul.mubr.f32.gmra.mxu0 %v1049
      %v1163 = vpop.f32.mrf.mxu0
      %v1164 = vadd.f32 0.0, %v1163
      %v1165 = vpop.f32.mrf.mxu0
      %1166 = vmatprep.mubr.f32.mxu0 0.0
      %1167 = vmatmul.mubr.f32.gmra.mxu0 %v1050
      %v1168 = vpop.f32.mrf.mxu0
      %v1169 = vadd.f32 0.0, %v1168
      %v1170 = vpop.f32.mrf.mxu0
      %1171 = vmatprep.mubr.f32.mxu0 0.0
      %1172 = vmatmul.mubr.f32.gmra.mxu0 %v1051
      %v1173 = vpop.f32.mrf.mxu0
      %v1174 = vadd.f32 0.0, %v1173
      %v1175 = vpop.f32.mrf.mxu0
      %1176 = vmatprep.mubr.f32.mxu0 0.0
      %1177 = vmatmul.mubr.f32.gmra.mxu0 %v1052
      %v1178 = vpop.f32.mrf.mxu0
      %v1179 = vadd.f32 0.0, %v1178
      %v1180 = vpop.f32.mrf.mxu0
      %1181 = vmatprep.mubr.f32.mxu0 0.0
      %1182 = vmatmul.mubr.f32.gmra.mxu0 %v1053
      %v1183 = vpop.f32.mrf.mxu0
      %v1184 = vadd.f32 0.0, %v1183
      %v1185 = vpop.f32.mrf.mxu0
      %1186 = vmatprep.mubr.f32.mxu0 0.0
      %1187 = vmatmul.mubr.f32.gmra.mxu0 %v1054
      %v1188 = vpop.f32.mrf.mxu0
      %v1189 = vadd.f32 0.0, %v1188
      %v1190 = vpop.f32.mrf.mxu0
      %1191 = vmatprep.mubr.f32.mxu0 0.0
      %1192 = vmatmul.mubr.f32.gmra.mxu0 %v1055
      %v1193 = vpop.f32.mrf.mxu0
      %v1194 = vadd.f32 0.0, %v1193
      %v1195 = vpop.f32.mrf.mxu0
      %1196 = vmatprep.mubr.f32.mxu0 0.0
      %1197 = vmatmul.mubr.f32.gmra.mxu0 %v1056
      %v1198 = vpop.f32.mrf.mxu0
      %v1199 = vadd.f32 0.0, %v1198
      %v1200 = vpop.f32.mrf.mxu0
      %1201 = vdwg.mxu0
      %1202 = vst [vmem:[%s271] sm:$0xff] %v1124
      %1203 = vst [vmem:[%s271 + $0x8] sm:$0xff] %v1129
      %1204 = vst [vmem:[%s271 + $0x10] sm:$0xff] %v1134
      %1205 = vst [vmem:[%s271 + $0x18] sm:$0xff] %v1139
      %1206 = vst [vmem:[%s271 + $0x20] sm:$0xff] %v1144
      %1207 = vst [vmem:[%s271 + $0x28] sm:$0xff] %v1149
      %1208 = vst [vmem:[%s271 + $0x30] sm:$0xff] %v1154
      %1209 = vst [vmem:[%s271 + $0x38] sm:$0xff] %v1159
      %1210 = vst [vmem:[%s271 + $0x40] sm:$0xff] %v1164
      %1211 = vst [vmem:[%s271 + $0x48] sm:$0xff] %v1169
      %1212 = vst [vmem:[%s271 + $0x50] sm:$0xff] %v1174
      %1213 = vst [vmem:[%s271 + $0x58] sm:$0xff] %v1179
      %1214 = vst [vmem:[%s271 + $0x60] sm:$0xff] %v1184
      %1215 = vst [vmem:[%s271 + $0x68] sm:$0xff] %v1189
      %1216 = vst [vmem:[%s271 + $0x70] sm:$0xff] %v1194
      %1217 = vst [vmem:[%s271 + $0x78] sm:$0xff] %v1199
      %p1218 = scmp.lt.s32.totalorder %s17, 1
      %s1219 = scalar_select %p1218, %s17, 1
      %s1220 = smul.addr %s1219, 16
      %s1221 = smul.addr %s1220, 8
      %s1222 = scalar_lea.vmem %s6, %s1221
      // Predicated region
      $region45: #{gat_layer_forward.1} parent=43 // pred_check
        %p1223 = pneg %p171
      $region46: #{gat_layer_forward.1} parent=43 // pred_check_branch
        %1225 = sbr.rel (%p1223) target = $region48
      $region47: #{gat_layer_forward.1} parent=43 // pred_region
        _
      $region48: #{gat_layer_forward.1} parent=43 // pred_fallthru
        _
    $region44: #{gat_layer_forward.1} parent=5 // pred_fallthru
      _
    %p1226 = scmp.le.s32.totalorder 2, %s12
    // Predicated region
    $region49: #{gat_layer_forward.1} parent=5 // pred_check
      %p1227 = pneg %p1226
    $region50: #{gat_layer_forward.1} parent=5 // pred_check_branch
      %1229 = sbr.rel (%p1227) target = $region52
    $region51: #{gat_layer_forward.1} parent=5 // pred_region
      %s1230 = ssub.s32 %s12, 2
      // Predicated region
      $region53: #{gat_layer_forward.1} parent=51 // pred_check
        %p1231 = pneg %p177
      $region54: #{gat_layer_forward.1} parent=51 // pred_check_branch
        %1233 = sbr.rel (%p1231) target = $region56
      $region55: #{gat_layer_forward.1} parent=51 // pred_region
        %p1234 = scmp.lt.s32.totalorder %s18, 1
        %s1235 = scalar_select %p1234, %s18, 1
        %s1236 = smul.addr %s1235, 16
        %s1237 = smul.addr %s1236, 8
        %s1238 = scalar_lea.vmem %s6, %s1237
      $region56: #{gat_layer_forward.1} parent=51 // pred_fallthru
        _
    $region52: #{gat_layer_forward.1} parent=5 // pred_fallthru
      _
  $region6: #{gat_layer_forward.1} parent=0 // loop_footer
    %s16 = sadd.s32 1, %s12
  $region7: #{gat_layer_forward.1} parent=0 // loop_footer_branch
    %11 = sbr.rel target = $region3
  $region8: #{gat_layer_forward.1} parent=0 // loop_exit
    _

</llo_original>
